<compile_context>
chip_gen: v5e
topology: v5e:2x2
jax: 0.10.0
libtpu: 0.0.40
codegen_flags: <defaults>
</compile_context>

<pallas_src>
import functools

import jax
import jax.numpy as jnp
import numpy as np
from jax.experimental import pallas as pl
from jax.experimental.pallas import tpu as pltpu


def _box_band(n, ksize):
    """(n, n) matrix B with B[i, m] = multiplicity of reflected index m inside the
    length-`ksize` window centred at i (torch 'reflect' padding baked in)."""
    p = (ksize - 1) // 2
    B = np.zeros((n, n), np.float32)
    for i in range(n):
        for d in range(-p, p + 1):
            m = i + d
            if m < 0:
                m = -m
            elif m >= n:
                m = 2 * (n - 1) - m
            B[i, m] += 1.0
    return B


def _artifacts_kernel(stats_ref, rsr_ref, rema_ref, pred_ref, tgt_ref,
                      brow_ref, bcolt_ref, out_ref, *, ksize, tile_h):
    b = pl.program_id(0)
    t = pl.program_id(1)
    n_win = ksize * ksize

    # Per-image scalars precomputed in XLA and held in SMEM.
    mean_p = stats_ref[b, 0]                       # mean of r_SR over H*W
    scale = stats_ref[b, 1]                        # loss_weight * var_patch**(1/5)

    # Mean-centred residual (local variance is shift invariant); full rows so the
    # banded row matrix can reach the reflect halo.  Lane width stays W.
    rc = rsr_ref[...] - mean_p                     # (H, W) f32
    rc2 = rc * rc

    # Separable reflect-padded k x k box sums on the MXU:
    #   S = B_row_tile @ rc @ B_col^T   (column matrix is pre-transposed).
    brow = brow_ref[...]                           # (tile_h, H)
    bcolt = bcolt_ref[...]                         # (W, W)
    hp = jax.lax.Precision.HIGHEST
    rs1 = jnp.dot(brow, rc, preferred_element_type=jnp.float32, precision=hp)
    rs2 = jnp.dot(brow, rc2, preferred_element_type=jnp.float32, precision=hp)
    s1 = jnp.dot(rs1, bcolt, preferred_element_type=jnp.float32, precision=hp)
    s2 = jnp.dot(rs2, bcolt, preferred_element_type=jnp.float32, precision=hp)

    # Unbiased local variance (one-pass on the centred residual); clamp at 0 to
    # mirror the always-nonnegative two-pass formula under fp rounding.
    var_local = (s2 - (s1 * s1) * (1.0 / n_win)) * (1.0 / (n_win - 1))
    var_local = jnp.maximum(var_local, 0.0)

    # Core rows of this tile for the mask (8-aligned sublane slice).
    row0 = pl.multiple_of(t * tile_h, 8)
    rsr_tile = rsr_ref[pl.ds(row0, tile_h), :]
    overall = jnp.where(rsr_tile < rema_ref[...], 0.0, scale * var_local)  # (tile_h, W)

    # F.l1_loss(w*pred, w*target, 'none') == w * |pred - target| since w >= 0.
    ab = jnp.abs(tgt_ref[...].astype(jnp.float32) - pred_ref[...].astype(jnp.float32))
    out_ref[...] = (overall[None, :, :] * ab).astype(out_ref.dtype)


@functools.partial(jax.jit,
                   static_argnames=("kernel_size", "loss_weight", "tile_h"))
def artifacts_loss(pred, pred_ema, target, *, kernel_size=7, loss_weight=1.0,
                   tile_h=None):
    N, C, H, W = pred.shape
    p = (kernel_size - 1) // 2
    assert kernel_size % 2 == 1, "reflect/unfold semantics assume an odd kernel_size"
    assert loss_weight >= 0.0, "loss_weight must be >= 0 (|w*a - w*b| == w*|a - b|)"
    assert p < H and p < W, "reflect pad requires (kernel_size-1)//2 < H, W"

    itemsize = pred.dtype.itemsize

    # Generation-aware VMEM budget (v5e/v6e: 128 MiB, v7x: 64 MiB per core).
    try:
        vmem_cap = int(pltpu.get_tpu_info().vmem_capacity_bytes)
    except Exception:  # pragma: no cover - conservative fallback
        vmem_cap = 64 << 20

    # Pick the largest H tile whose double-buffered per-step footprint (plus the
    # per-batch resident r_SR / column band) stays well inside the budget.
    if tile_h is None:
        tile_h = 8 if H % 8 == 0 else H
        for cand in (512, 256, 128, 64, 32, 16, 8):
            if H % cand != 0:
                continue
            per_step = (3 * C * cand * W * itemsize   # pred / target / out blocks
                        + cand * W * 4                # r_EMA block
                        + cand * H * 4                # row band block
                        + 12 * cand * W * 4)          # f32 temporaries
            fixed = 2 * H * W * 4 + W * W * 4         # resident r_SR + column band
            if 2 * per_step + fixed <= 0.35 * vmem_cap:
                tile_h = cand
                break
    assert H % tile_h == 0 and (tile_h % 8 == 0 or tile_h == H)
    n_tiles = H // tile_h

    f32 = jnp.float32
    pred_f = pred.astype(f32)
    ema_f = pred_ema.astype(f32)
    tgt_f = target.astype(f32)

    # --- hoisted to XLA: channel reductions + per-image patch statistics ------
    r_sr = jnp.sum(jnp.abs(tgt_f - pred_f), axis=1)                 # (N, H, W)
    r_ema = jnp.sum(jnp.abs(tgt_f - ema_f), axis=1)                 # (N, H, W)
    n_p = H * W
    mean_p = jnp.mean(r_sr, axis=(1, 2))                            # (N,)
    var_p = jnp.sum((r_sr - mean_p[:, None, None]) ** 2, axis=(1, 2)) / (n_p - 1)
    scale = loss_weight * var_p ** (1.0 / 5.0)                      # (N,)
    stats = jnp.stack([mean_p, scale], axis=1).astype(f32)          # (N, 2) -> SMEM

    # Constant banded matrices with the reflect padding baked in; the column
    # matrix is pre-transposed so the kernel computes B_row @ rc @ B_col^T.
    b_row = jnp.asarray(_box_band(H, kernel_size))                  # (H, H)
    b_colt = jnp.asarray(_box_band(W, kernel_size).T)               # (W, W)

    # Live-set estimate (double-buffered blocks + f32 temporaries) just to keep
    # small cases from sitting at the tiny scoped default; clamp to ~87% of VMEM.
    est = (2 * H * W * 4                                 # r_SR (resident, x2 bufs)
           + 2 * tile_h * W * 4                          # r_EMA
           + 2 * 2 * C * tile_h * W * itemsize           # pred + target
           + 2 * C * tile_h * W * itemsize               # out
           + 2 * tile_h * H * 4 + 2 * W * W * 4          # band matrices
           + 12 * tile_h * W * 4 + 2 * H * W * 4         # f32 temporaries
           + (4 << 20))                                  # compiler scratch headroom
    vmem_limit = int(min(max(est, 32 << 20), int(0.875 * vmem_cap)))

    kern = functools.partial(_artifacts_kernel, ksize=kernel_size, tile_h=tile_h)

    return pl.pallas_call(
        kern,
        out_shape=jax.ShapeDtypeStruct((N, C, H, W), pred.dtype),
        grid=(N, n_tiles),
        in_specs=[
            pl.BlockSpec(memory_space=pltpu.MemorySpace.SMEM),           # stats (N,2)
            pl.BlockSpec((None, H, W), lambda b, t: (b, 0, 0)),          # r_SR, full rows
            pl.BlockSpec((None, tile_h, W), lambda b, t: (b, t, 0)),     # r_EMA tile
            pl.BlockSpec((None, C, tile_h, W), lambda b, t: (b, 0, t, 0)),  # pred tile
            pl.BlockSpec((None, C, tile_h, W), lambda b, t: (b, 0, t, 0)),  # target tile
            pl.BlockSpec((tile_h, H), lambda b, t: (t, 0)),              # row band tile
            pl.BlockSpec((W, W), lambda b, t: (0, 0)),                   # col band (const)
        ],
        out_specs=pl.BlockSpec((None, C, tile_h, W), lambda b, t: (b, 0, t, 0)),
        compiler_params=pltpu.CompilerParams(
            dimension_semantics=("parallel", "parallel"),
            vmem_limit_bytes=vmem_limit),
    )(stats, r_sr, r_ema, pred, target, b_row, b_colt)


def _reference(pred, ema, tgt, ksize, loss_weight):
    """Pure-JAX reference mirroring the PyTorch forward (unfold-style)."""
    r_ema = jnp.sum(jnp.abs(tgt - ema), axis=1, keepdims=True)
    r_sr = jnp.sum(jnp.abs(tgt - pred), axis=1, keepdims=True)
    N, _, H, W = r_sr.shape
    n_p = H * W
    mean_p = jnp.mean(r_sr, axis=(1, 2, 3), keepdims=True)
    var_p = jnp.sum((r_sr - mean_p) ** 2, axis=(1, 2, 3), keepdims=True) / (n_p - 1)
    patch_w = var_p ** (1.0 / 5.0)

    p = (ksize - 1) // 2
    rp = jnp.pad(r_sr, ((0, 0), (0, 0), (p, p), (p, p)), mode='reflect')
    wins = []
    for dy in range(ksize):
        for dx in range(ksize):
            wins.append(rp[:, :, dy:dy + H, dx:dx + W])
    wins = jnp.stack(wins, axis=-1)
    wmean = jnp.mean(wins, axis=-1, keepdims=True)
    pix_w = jnp.sum((wins - wmean) ** 2, axis=-1) / (ksize * ksize - 1)

    overall = patch_w * pix_w
    overall = jnp.where(r_sr < r_ema, 0.0, overall)
    return loss_weight * jnp.abs(overall * pred - overall * tgt)


if __name__ == "__main__":
    key = jax.random.PRNGKey(0)
    k1, k2, k3 = jax.random.split(key, 3)
    N, C, H, W = 2, 3, 16, 16
    pred = jax.random.uniform(k1, (N, C, H, W), dtype=jnp.float32)
    pred_ema = jax.random.uniform(k2, (N, C, H, W), dtype=jnp.float32)
    target = jax.random.uniform(k3, (N, C, H, W), dtype=jnp.float32)

    # ArtifactsLoss(loss_weight=1.0, kernel_size=7) — no learned parameters.
    # tile_h=8 exercises the multi-tile (H-tiled, halo-via-band-matrix) path.
    out = artifacts_loss(pred, pred_ema, target, kernel_size=7, loss_weight=1.0,
                         tile_h=8)
    out = jax.block_until_ready(out)

    ref = jax.block_until_ready(_reference(pred, pred_ema, target, 7, 1.0))
    np.testing.assert_allclose(np.asarray(out), np.asarray(ref),
                               rtol=5e-4, atol=1e-5)
    print("KERNEL_OK")
</pallas_src>

<mosaic_0001>
module attributes {stable_mosaic.version = 11 : i64} {
  func.func @_artifacts_kernel(%arg0: i32, %arg1: i32, %arg2: memref<2x2xf32, #tpu.memory_space<smem>>, %arg3: memref<1x16x16xf32, #tpu.memory_space<vmem>>, %arg4: memref<1x8x16xf32, #tpu.memory_space<vmem>>, %arg5: memref<1x3x8x16xf32, #tpu.memory_space<vmem>>, %arg6: memref<1x3x8x16xf32, #tpu.memory_space<vmem>>, %arg7: memref<8x16xf32, #tpu.memory_space<vmem>>, %arg8: memref<16x16xf32, #tpu.memory_space<vmem>>, %arg9: memref<1x3x8x16xf32, #tpu.memory_space<vmem>>) attributes {dimension_semantics = [#tpu.dimension_semantics<parallel>, #tpu.dimension_semantics<parallel>], iteration_bounds = array<i64: 2, 2>, scalar_prefetch = 0 : i64, scratch_operands = 0 : i64, tpu.core_type = #tpu.core_type<tc>, window_params = [{transform_indices = @transform_0, window_bounds = array<i64: 2, 2>}, {transform_indices = @transform_1, window_bounds = array<i64: 1, 16, 16>}, {transform_indices = @transform_2, window_bounds = array<i64: 1, 8, 16>}, {transform_indices = @transform_3, window_bounds = array<i64: 1, 3, 8, 16>}, {transform_indices = @transform_4, window_bounds = array<i64: 1, 3, 8, 16>}, {transform_indices = @transform_5, window_bounds = array<i64: 8, 16>}, {pipeline_mode = #tpu.pipeline_mode<synchronous>, transform_indices = @transform_6, window_bounds = array<i64: 16, 16>}, {transform_indices = @transform_7, window_bounds = array<i64: 1, 3, 8, 16>}]} {
    %0 = arith.index_cast %arg0 : i32 to index
    %c0 = arith.constant 0 : index
    %1 = memref.load %arg2[%0, %c0] : memref<2x2xf32, #tpu.memory_space<smem>>
    %2 = arith.index_cast %arg0 : i32 to index
    %c1 = arith.constant 1 : index
    %3 = memref.load %arg2[%2, %c1] : memref<2x2xf32, #tpu.memory_space<smem>>
    %c0_0 = arith.constant 0 : index
    %c0_1 = arith.constant 0 : index
    %c0_2 = arith.constant 0 : index
    %4 = vector.load %arg3[%c0_0, %c0_1, %c0_2] : memref<1x16x16xf32, #tpu.memory_space<vmem>>, vector<1x16x16xf32>
    %5 = vector.shape_cast %4 : vector<1x16x16xf32> to vector<16x16xf32>
    %6 = vector.broadcast %1 : f32 to vector<16x16xf32>
    %7 = arith.subf %5, %6 : vector<16x16xf32>
    %8 = arith.mulf %7, %7 : vector<16x16xf32>
    %c0_3 = arith.constant 0 : index
    %c0_4 = arith.constant 0 : index
    %9 = vector.load %arg7[%c0_3, %c0_4] : memref<8x16xf32, #tpu.memory_space<vmem>>, vector<8x16xf32>
    %c0_5 = arith.constant 0 : index
    %c0_6 = arith.constant 0 : index
    %10 = vector.load %arg8[%c0_5, %c0_6] : memref<16x16xf32, #tpu.memory_space<vmem>>, vector<16x16xf32>
    %cst = arith.constant dense<0.000000e+00> : vector<8x16xf32>
    %11 = tpu.matmul %9, %7, %cst {dimension_numbers = #tpu.dot_dimension_numbers<[1], [0], [0], [1], [0, 0, 1, 1], [], []>, precision = #tpu.contract_precision<fp32>} : vector<8x16xf32>, vector<16x16xf32>, vector<8x16xf32> -> vector<8x16xf32>
    %cst_7 = arith.constant dense<0.000000e+00> : vector<8x16xf32>
    %12 = tpu.matmul %9, %8, %cst_7 {dimension_numbers = #tpu.dot_dimension_numbers<[1], [0], [0], [1], [0, 0, 1, 1], [], []>, precision = #tpu.contract_precision<fp32>} : vector<8x16xf32>, vector<16x16xf32>, vector<8x16xf32> -> vector<8x16xf32>
    %cst_8 = arith.constant dense<0.000000e+00> : vector<8x16xf32>
    %13 = tpu.matmul %11, %10, %cst_8 {dimension_numbers = #tpu.dot_dimension_numbers<[1], [0], [0], [1], [0, 0, 1, 1], [], []>, precision = #tpu.contract_precision<fp32>} : vector<8x16xf32>, vector<16x16xf32>, vector<8x16xf32> -> vector<8x16xf32>
    %cst_9 = arith.constant dense<0.000000e+00> : vector<8x16xf32>
    %14 = tpu.matmul %12, %10, %cst_9 {dimension_numbers = #tpu.dot_dimension_numbers<[1], [0], [0], [1], [0, 0, 1, 1], [], []>, precision = #tpu.contract_precision<fp32>} : vector<8x16xf32>, vector<16x16xf32>, vector<8x16xf32> -> vector<8x16xf32>
    %15 = arith.mulf %13, %13 : vector<8x16xf32>
    %cst_10 = arith.constant 0.0204081628 : f32
    %16 = vector.broadcast %cst_10 : f32 to vector<8x16xf32>
    %17 = arith.mulf %15, %16 : vector<8x16xf32>
    %18 = arith.subf %14, %17 : vector<8x16xf32>
    %cst_11 = arith.constant 0.020833334 : f32
    %19 = vector.broadcast %cst_11 : f32 to vector<8x16xf32>
    %20 = arith.mulf %18, %19 : vector<8x16xf32>
    %cst_12 = arith.constant 0.000000e+00 : f32
    %21 = vector.broadcast %cst_12 : f32 to vector<8x16xf32>
    %22 = arith.maximumf %20, %21 : vector<8x16xf32>
    %c8_i32 = arith.constant 8 : i32
    %23 = arith.muli %arg1, %c8_i32 : i32
    %24 = tpu.assume_multiple %23, 8 : i32
    %c0_13 = arith.constant 0 : index
    %25 = arith.index_cast %24 : i32 to index
    %c0_14 = arith.constant 0 : index
    %26 = vector.load %arg3[%c0_13, %25, %c0_14] : memref<1x16x16xf32, #tpu.memory_space<vmem>>, vector<1x8x16xf32>
    %27 = vector.shape_cast %26 : vector<1x8x16xf32> to vector<8x16xf32>
    %c0_15 = arith.constant 0 : index
    %c0_16 = arith.constant 0 : index
    %c0_17 = arith.constant 0 : index
    %28 = vector.load %arg4[%c0_15, %c0_16, %c0_17] : memref<1x8x16xf32, #tpu.memory_space<vmem>>, vector<1x8x16xf32>
    %29 = vector.shape_cast %28 : vector<1x8x16xf32> to vector<8x16xf32>
    %30 = arith.cmpf olt, %27, %29 : vector<8x16xf32>
    %31 = vector.broadcast %3 : f32 to vector<8x16xf32>
    %32 = arith.mulf %31, %22 : vector<8x16xf32>
    %cst_18 = arith.constant 0.000000e+00 : f32
    %33 = vector.broadcast %cst_18 : f32 to vector<8x16xf32>
    %34 = arith.select %30, %33, %32 : vector<8x16xi1>, vector<8x16xf32>
    %c0_19 = arith.constant 0 : index
    %c0_20 = arith.constant 0 : index
    %c0_21 = arith.constant 0 : index
    %c0_22 = arith.constant 0 : index
    %35 = vector.load %arg6[%c0_19, %c0_20, %c0_21, %c0_22] : memref<1x3x8x16xf32, #tpu.memory_space<vmem>>, vector<1x3x8x16xf32>
    %36 = vector.shape_cast %35 : vector<1x3x8x16xf32> to vector<3x8x16xf32>
    %c0_23 = arith.constant 0 : index
    %c0_24 = arith.constant 0 : index
    %c0_25 = arith.constant 0 : index
    %c0_26 = arith.constant 0 : index
    %37 = vector.load %arg5[%c0_23, %c0_24, %c0_25, %c0_26] : memref<1x3x8x16xf32, #tpu.memory_space<vmem>>, vector<1x3x8x16xf32>
    %38 = vector.shape_cast %37 : vector<1x3x8x16xf32> to vector<3x8x16xf32>
    %39 = arith.subf %36, %38 : vector<3x8x16xf32>
    %40 = math.absf %39 : vector<3x8x16xf32>
    %41 = vector.shape_cast %34 : vector<8x16xf32> to vector<1x8x16xf32>
    %42 = vector.broadcast %41 : vector<1x8x16xf32> to vector<3x8x16xf32>
    %43 = arith.mulf %42, %40 : vector<3x8x16xf32>
    %c0_27 = arith.constant 0 : index
    %c0_28 = arith.constant 0 : index
    %c0_29 = arith.constant 0 : index
    %c0_30 = arith.constant 0 : index
    %44 = vector.load %arg9[%c0_27, %c0_28, %c0_29, %c0_30] : memref<1x3x8x16xf32, #tpu.memory_space<vmem>>, vector<1x3x8x16xf32>
    %45 = vector.shape_cast %44 : vector<1x3x8x16xf32> to vector<3x8x16xf32>
    %46 = vector.shape_cast %43 : vector<3x8x16xf32> to vector<1x3x8x16xf32>
    tpu.vector_store %arg9[%c0_27, %c0_28, %c0_29, %c0_30], %46 {strides = array<i32>} : memref<1x3x8x16xf32, #tpu.memory_space<vmem>>, vector<1x3x8x16xf32>,
    return
  }
  func.func @transform_0(%arg0: i32, %arg1: i32) -> (i32, i32) {
    %c0_i32 = arith.constant 0 : i32
    %c0_i32_0 = arith.constant 0 : i32
    %c0_i32_1 = arith.constant 0 : i32
    return %c0_i32, %c0_i32_0 : i32, i32
  }
  func.func @transform_1(%arg0: i32, %arg1: i32) -> (i32, i32, i32) {
    %c0_i32 = arith.constant 0 : i32
    %c0_i32_0 = arith.constant 0 : i32
    %c0_i32_1 = arith.constant 0 : i32
    return %arg0, %c0_i32, %c0_i32_0 : i32, i32, i32
  }
  func.func @transform_2(%arg0: i32, %arg1: i32) -> (i32, i32, i32) {
    %c0_i32 = arith.constant 0 : i32
    %c0_i32_0 = arith.constant 0 : i32
    return %arg0, %arg1, %c0_i32 : i32, i32, i32
  }
  func.func @transform_3(%arg0: i32, %arg1: i32) -> (i32, i32, i32, i32) {
    %c0_i32 = arith.constant 0 : i32
    %c0_i32_0 = arith.constant 0 : i32
    %c0_i32_1 = arith.constant 0 : i32
    return %arg0, %c0_i32, %arg1, %c0_i32_0 : i32, i32, i32, i32
  }
  func.func @transform_4(%arg0: i32, %arg1: i32) -> (i32, i32, i32, i32) {
    %c0_i32 = arith.constant 0 : i32
    %c0_i32_0 = arith.constant 0 : i32
    %c0_i32_1 = arith.constant 0 : i32
    return %arg0, %c0_i32, %arg1, %c0_i32_0 : i32, i32, i32, i32
  }
  func.func @transform_5(%arg0: i32, %arg1: i32) -> (i32, i32) {
    %c0_i32 = arith.constant 0 : i32
    %c0_i32_0 = arith.constant 0 : i32
    return %arg1, %c0_i32 : i32, i32
  }
  func.func @transform_6(%arg0: i32, %arg1: i32) -> (i32, i32) {
    %c0_i32 = arith.constant 0 : i32
    %c0_i32_0 = arith.constant 0 : i32
    %c0_i32_1 = arith.constant 0 : i32
    return %c0_i32, %c0_i32_0 : i32, i32
  }
  func.func @transform_7(%arg0: i32, %arg1: i32) -> (i32, i32, i32, i32) {
    %c0_i32 = arith.constant 0 : i32
    %c0_i32_0 = arith.constant 0 : i32
    %c0_i32_1 = arith.constant 0 : i32
    return %arg0, %c0_i32, %arg1, %c0_i32_0 : i32, i32, i32, i32
  }
}

</mosaic_0001>

<llo_original>
// kernel: artifacts_loss.1
$region0: #{artifacts_loss.1}
  #allocation0 [shape = 'u32[]', space=smem, size = 0x4, offset = 0x4, fixed_abs, tag = 'smem constant byte address 0x4 - core index']
  #allocation1 [shape = 'u32[72,128]{1,0:T(1,128)}', space=vmem, size = 0x9000, scoped, tag = 'internal scratch']
  %s0 = inlined_call_operand.vmem [shape: f32[2,2], index: 0, kind: input, shape index: {}]
  %s1 = inlined_call_operand.vmem [shape: f32[2,16,16], index: 1, kind: input, shape index: {}]
  %s2 = inlined_call_operand.vmem [shape: f32[2,16,16], index: 2, kind: input, shape index: {}]
  %s3 = inlined_call_operand.vmem [shape: f32[2,3,16,16], index: 3, kind: input, shape index: {}]
  %s4 = inlined_call_operand.vmem [shape: f32[2,3,16,16], index: 4, kind: input, shape index: {}]
  %s5 = inlined_call_operand.vmem [shape: f32[16,16], index: 5, kind: input, shape index: {}]
  %s6 = inlined_call_operand.vmem [shape: f32[16,16], index: 6, kind: input, shape index: {}]
  %s7 = inlined_call_operand.hbm [shape: f32[2,3,16,16], index: 7, kind: output, shape index: {}]
  %s8 = sld [smem:[#allocation0]]
  $region141: #{artifacts_loss.1} parent=0
    _
  %s10 = ssub.s32 1, %s8
  %s11 = scalar_select 0, %s10, %s8
  $region1: #{artifacts_loss.1} parent=0
    #allocation2 [shape = 'u8[1024]{0}', space=smem, size = 0x400, scoped, tag = 'input window, operand 0, single buffered']
    #allocation3 [shape = 's32[2]{0}', space=sflag, size = 0x8, scoped, tag = 'scoped memory for artifacts_loss.1']
    #allocation4 [shape = 's32[2]{0}', space=sflag, size = 0x8, scoped, tag = 'scoped memory for artifacts_loss.1']
    #allocation5 [shape = 'u8[24576]{0}', space=vmem, size = 0x6000, scoped, tag = 'input window, operand 3']
    #allocation6 [shape = 'u8[24576]{0}', space=vmem, size = 0x6000, scoped, tag = 'input window, operand 4']
    #allocation7 [shape = 'u8[24576]{0}', space=vmem, size = 0x6000, scoped, tag = 'output window, operand 0']
    %12 = vsyncpa [#allocation4], 0
    %13 = vsyncpa [#allocation3], 0
    %s14 = scalar_lea.sflag [#allocation3], 1
    %15 = vsyncpa %s14, 0
    loop: start=0, step=1, limit=6
    $region2: #{artifacts_loss.1} parent=1 // loop_pre_header
      _
    $region3: #{artifacts_loss.1} parent=1 // loop_header
      %s17 = sphi 0, %s21
      %p18 = scmp.ge.s32.totalorder %s17, 6
      %s24 = sphi 0, %s36
      %s25 = sphi 0, %s32
      %s26 = sphi 0, %s24
      %s27 = sphi 0, %s25
      %s28 = sphi 0, %s26
      %s29 = sphi 0, %s27
      %s37 = sphi 0, %s37
      %s39 = sphi 0, %s37
      %s40 = sphi 0, %s39
      %s54 = sphi 0, %s40
      %s60 = sphi 0, %s62
      %s63 = sphi 0, %s60
      %s64 = sphi 0, %s63
      %s80 = sphi 0, %s64
      %s88 = sphi 0, %s90
      %s91 = sphi 0, %s88
      %s92 = sphi 0, %s91
      %s108 = sphi 0, %s92
      %s116 = sphi 0, %s118
      %s119 = sphi 0, %s116
      %s120 = sphi 0, %s119
      %s136 = sphi 0, %s120
      %s144 = sphi 0, %s146
      %s147 = sphi 0, %s144
      %s148 = sphi 0, %s147
      %s164 = sphi 0, %s148
      %s170 = sphi 0, %s172
      %s173 = sphi 0, %s170
      %s174 = sphi 0, %s173
      %s190 = sphi 0, %s174
      %s194 = sphi 0, %s194
      %s196 = sphi 0, %s194
      %s197 = sphi 0, %s196
      %s211 = sphi 0, %s197
      %s219 = sphi 0, %s221
      %s222 = sphi 0, %s219
      %s223 = sphi 0, %s222
      %s239 = sphi 0, %s223
    $region4: #{artifacts_loss.1} parent=1 // loop_header_branch
      %20 = sbr.rel (%p18) target = $region8
    $region5: #{artifacts_loss.1} parent=1 // loop_body
      %s22 = ssub.s32 %s17, 1
      %s23 = ssub.s32 %s17, 2
      %s30 = sadd.s32 1, %s25
      %p31 = scmp.ge.s32.totalorder %s30, 2
      %s32 = scalar_select %p31, 0, %s30
      %s33 = sadd.s32 1, %s24
      %s34 = scalar_select %p31, %s33, %s24
      %p35 = scmp.ge.s32.totalorder %s34, 2
      %s36 = scalar_select %p35, 0, %s34
      %s38 = sadd.s32 %s37, 1
      %p41 = scmp.eq.s32.totalorder %s17, 3
      %p42 = scmp.ne.s32.totalorder %s37, %s39
      %p43 = scmp.eq.s32.totalorder %s17, 0
      %p44 = por %p42, %p43
      %p45 = scmp.ne.s32.totalorder %s37, %s39
      %p46 = scmp.eq.s32.totalorder %s22, 3
      %p47 = por %p45, %p46
      %p48 = scmp.ne.s32.totalorder %s39, %s40
      %p49 = scmp.eq.s32.totalorder %s22, 0
      %p50 = por %p48, %p49
      %p51 = scmp.ne.s32.totalorder %s39, %s40
      %p52 = scmp.eq.s32.totalorder %s23, 3
      %p53 = por %p51, %p52
      %p55 = scmp.ne.s32.totalorder %s40, %s54
      %p56 = scmp.eq.s32.totalorder %s23, 0
      %p57 = por %p55, %p56
      %s58 = ssub.s32 %s24, %s36
      %p59 = scmp.eq.s32.totalorder %s58, 0
      %s61 = sadd.s32 %s60, 1
      %s62 = scalar_select %p59, %s60, %s61
      %p65 = pneg %p59
      %p66 = scmp.eq.s32.totalorder %s17, 3
      %p67 = por %p65, %p66
      %p68 = scmp.ne.s32.totalorder %s60, %s63
      %p69 = scmp.eq.s32.totalorder %s17, 0
      %p70 = por %p68, %p69
      %p71 = scmp.ne.s32.totalorder %s60, %s63
      %p72 = scmp.eq.s32.totalorder %s22, 3
      %p73 = por %p71, %p72
      %p74 = scmp.ne.s32.totalorder %s63, %s64
      %p75 = scmp.eq.s32.totalorder %s22, 0
      %p76 = por %p74, %p75
      %p77 = scmp.ne.s32.totalorder %s63, %s64
      %p78 = scmp.eq.s32.totalorder %s23, 3
      %p79 = por %p77, %p78
      %p81 = scmp.ne.s32.totalorder %s64, %s80
      %p82 = scmp.eq.s32.totalorder %s23, 0
      %p83 = por %p81, %p82
      %s84 = ssub.s32 %s24, %s36
      %s85 = ssub.s32 %s25, %s32
      %s86 = sor.u32 %s84, %s85
      %p87 = scmp.eq.s32.totalorder %s86, 0
      %s89 = sadd.s32 %s88, 1
      %s90 = scalar_select %p87, %s88, %s89
      %p93 = pneg %p87
      %p94 = scmp.eq.s32.totalorder %s17, 3
      %p95 = por %p93, %p94
      %p96 = scmp.ne.s32.totalorder %s88, %s91
      %p97 = scmp.eq.s32.totalorder %s17, 0
      %p98 = por %p96, %p97
      %p99 = scmp.ne.s32.totalorder %s88, %s91
      %p100 = scmp.eq.s32.totalorder %s22, 3
      %p101 = por %p99, %p100
      %p102 = scmp.ne.s32.totalorder %s91, %s92
      %p103 = scmp.eq.s32.totalorder %s22, 0
      %p104 = por %p102, %p103
      %p105 = scmp.ne.s32.totalorder %s91, %s92
      %p106 = scmp.eq.s32.totalorder %s23, 3
      %p107 = por %p105, %p106
      %p109 = scmp.ne.s32.totalorder %s92, %s108
      %p110 = scmp.eq.s32.totalorder %s23, 0
      %p111 = por %p109, %p110
      %s112 = ssub.s32 %s24, %s36
      %s113 = ssub.s32 %s25, %s32
      %s114 = sor.u32 %s112, %s113
      %p115 = scmp.eq.s32.totalorder %s114, 0
      %s117 = sadd.s32 %s116, 1
      %s118 = scalar_select %p115, %s116, %s117
      %p121 = pneg %p115
      %p122 = scmp.eq.s32.totalorder %s17, 3
      %p123 = por %p121, %p122
      %p124 = scmp.ne.s32.totalorder %s116, %s119
      %p125 = scmp.eq.s32.totalorder %s17, 0
      %p126 = por %p124, %p125
      %p127 = scmp.ne.s32.totalorder %s116, %s119
      %p128 = scmp.eq.s32.totalorder %s22, 3
      %p129 = por %p127, %p128
      %p130 = scmp.ne.s32.totalorder %s119, %s120
      %p131 = scmp.eq.s32.totalorder %s22, 0
      %p132 = por %p130, %p131
      %p133 = scmp.ne.s32.totalorder %s119, %s120
      %p134 = scmp.eq.s32.totalorder %s23, 3
      %p135 = por %p133, %p134
      %p137 = scmp.ne.s32.totalorder %s120, %s136
      %p138 = scmp.eq.s32.totalorder %s23, 0
      %p139 = por %p137, %p138
      %s140 = ssub.s32 %s24, %s36
      %s141 = ssub.s32 %s25, %s32
      %s142 = sor.u32 %s140, %s141
      %p143 = scmp.eq.s32.totalorder %s142, 0
      %s145 = sadd.s32 %s144, 1
      %s146 = scalar_select %p143, %s144, %s145
      %p149 = pneg %p143
      %p150 = scmp.eq.s32.totalorder %s17, 3
      %p151 = por %p149, %p150
      %p152 = scmp.ne.s32.totalorder %s144, %s147
      %p153 = scmp.eq.s32.totalorder %s17, 0
      %p154 = por %p152, %p153
      %p155 = scmp.ne.s32.totalorder %s144, %s147
      %p156 = scmp.eq.s32.totalorder %s22, 3
      %p157 = por %p155, %p156
      %p158 = scmp.ne.s32.totalorder %s147, %s148
      %p159 = scmp.eq.s32.totalorder %s22, 0
      %p160 = por %p158, %p159
      %p161 = scmp.ne.s32.totalorder %s147, %s148
      %p162 = scmp.eq.s32.totalorder %s23, 3
      %p163 = por %p161, %p162
      %p165 = scmp.ne.s32.totalorder %s148, %s164
      %p166 = scmp.eq.s32.totalorder %s23, 0
      %p167 = por %p165, %p166
      %s168 = ssub.s32 %s25, %s32
      %p169 = scmp.eq.s32.totalorder %s168, 0
      %s171 = sadd.s32 %s170, 1
      %s172 = scalar_select %p169, %s170, %s171
      %p175 = pneg %p169
      %p176 = scmp.eq.s32.totalorder %s17, 3
      %p177 = por %p175, %p176
      %p178 = scmp.ne.s32.totalorder %s170, %s173
      %p179 = scmp.eq.s32.totalorder %s17, 0
      %p180 = por %p178, %p179
      %p181 = scmp.ne.s32.totalorder %s170, %s173
      %p182 = scmp.eq.s32.totalorder %s22, 3
      %p183 = por %p181, %p182
      %p184 = scmp.ne.s32.totalorder %s173, %s174
      %p185 = scmp.eq.s32.totalorder %s22, 0
      %p186 = por %p184, %p185
      %p187 = scmp.ne.s32.totalorder %s173, %s174
      %p188 = scmp.eq.s32.totalorder %s23, 3
      %p189 = por %p187, %p188
      %p191 = scmp.ne.s32.totalorder %s174, %s190
      %p192 = scmp.eq.s32.totalorder %s23, 0
      %p193 = por %p191, %p192
      %s195 = sadd.s32 %s194, 1
      %p198 = scmp.eq.s32.totalorder %s17, 3
      %p199 = scmp.ne.s32.totalorder %s194, %s196
      %p200 = scmp.eq.s32.totalorder %s17, 0
      %p201 = por %p199, %p200
      %p202 = scmp.ne.s32.totalorder %s194, %s196
      %p203 = scmp.eq.s32.totalorder %s22, 3
      %p204 = por %p202, %p203
      %p205 = scmp.ne.s32.totalorder %s196, %s197
      %p206 = scmp.eq.s32.totalorder %s22, 0
      %p207 = por %p205, %p206
      %p208 = scmp.ne.s32.totalorder %s196, %s197
      %p209 = scmp.eq.s32.totalorder %s23, 3
      %p210 = por %p208, %p209
      %p212 = scmp.ne.s32.totalorder %s197, %s211
      %p213 = scmp.eq.s32.totalorder %s23, 0
      %p214 = por %p212, %p213
      %s215 = ssub.s32 %s24, %s36
      %s216 = ssub.s32 %s25, %s32
      %s217 = sor.u32 %s215, %s216
      %p218 = scmp.eq.s32.totalorder %s217, 0
      %s220 = sadd.s32 %s219, 1
      %s221 = scalar_select %p218, %s219, %s220
      %p224 = pneg %p218
      %p225 = scmp.eq.s32.totalorder %s17, 3
      %p226 = por %p224, %p225
      %p227 = scmp.ne.s32.totalorder %s219, %s222
      %p228 = scmp.eq.s32.totalorder %s17, 0
      %p229 = por %p227, %p228
      %p230 = scmp.ne.s32.totalorder %s219, %s222
      %p231 = scmp.eq.s32.totalorder %s22, 3
      %p232 = por %p230, %p231
      %p233 = scmp.ne.s32.totalorder %s222, %s223
      %p234 = scmp.eq.s32.totalorder %s22, 0
      %p235 = por %p233, %p234
      %p236 = scmp.ne.s32.totalorder %s222, %s223
      %p237 = scmp.eq.s32.totalorder %s23, 3
      %p238 = por %p236, %p237
      %p240 = scmp.ne.s32.totalorder %s223, %s239
      %p241 = scmp.eq.s32.totalorder %s23, 0
      %p242 = por %p240, %p241
      %p243 = scmp.le.s32.totalorder 1, %s17
      %p244 = scmp.lt.s32.totalorder %s17, 5
      %p245 = pnand %p243, %p244
      %p246 = pneg %p245
      // Predicated region
      $region9: #{artifacts_loss.1} parent=5 // pred_check
        _
      $region10: #{artifacts_loss.1} parent=5 // pred_check_branch
        %248 = sbr.rel (%p245) target = $region12
      $region11: #{artifacts_loss.1} parent=5 // pred_region
        %s249 = ssub.s32 %s17, 1
        // Predicated region
        $region13: #{artifacts_loss.1} parent=11 // pred_check
          %p250 = pneg %p50
        $region14: #{artifacts_loss.1} parent=11 // pred_check_branch
          %252 = sbr.rel (%p250) target = $region16
        $region15: #{artifacts_loss.1} parent=11 // pred_region
          %254 = vsyncadd [#allocation4], 0
          %s256 = sshll.u32 %s0, 4
          %s257 = int_to_ptr.vmem [resolvable:$true] %s256
          %259 = dma.vmem_to_smem %s257, 32, [#allocation2], [#allocation4]
        $region16: #{artifacts_loss.1} parent=11 // pred_fallthru
          _
        // Predicated region
        $region17: #{artifacts_loss.1} parent=11 // pred_check
          %p260 = pneg %p207
        $region18: #{artifacts_loss.1} parent=11 // pred_check_branch
          %262 = sbr.rel (%p260) target = $region20
        $region19: #{artifacts_loss.1} parent=11 // pred_region
          _
        $region20: #{artifacts_loss.1} parent=11 // pred_fallthru
          _
      $region12: #{artifacts_loss.1} parent=5 // pred_fallthru
        _
      %p263 = scmp.lt.s32.totalorder %s17, 4
      // Predicated region
      $region21: #{artifacts_loss.1} parent=5 // pred_check
        %p264 = pneg %p263
      $region22: #{artifacts_loss.1} parent=5 // pred_check_branch
        %266 = sbr.rel (%p264) target = $region24
      $region23: #{artifacts_loss.1} parent=5 // pred_region
        // Predicated region
        $region25: #{artifacts_loss.1} parent=23 // pred_check
          %p267 = pneg %p70
        $region26: #{artifacts_loss.1} parent=23 // pred_check_branch
          %269 = sbr.rel (%p267) target = $region28
        $region27: #{artifacts_loss.1} parent=23 // pred_region
          %p270 = scmp.lt.s32.totalorder %s24, 1
          %s271 = scalar_select %p270, %s24, 1
          %s272 = smul.addr %s271, 2
          %s273 = smul.addr %s272, 8
          %s274 = scalar_lea.vmem %s1, %s273
        $region28: #{artifacts_loss.1} parent=23 // pred_fallthru
          _
        // Predicated region
        $region29: #{artifacts_loss.1} parent=23 // pred_check
          %p275 = pneg %p98
        $region30: #{artifacts_loss.1} parent=23 // pred_check_branch
          %277 = sbr.rel (%p275) target = $region32
        $region31: #{artifacts_loss.1} parent=23 // pred_region
          %p278 = scmp.lt.s32.totalorder %s24, 1
          %s279 = scalar_select %p278, %s24, 1
          %p280 = scmp.lt.s32.totalorder %s25, 1
          %s281 = scalar_select %p280, %s25, 1
          %s282 = smul.addr %s279, 2
          %s283 = sadd.s32 %s281, %s282
          %s284 = smul.addr %s283, 8
          %s285 = scalar_lea.vmem %s2, %s284
        $region32: #{artifacts_loss.1} parent=23 // pred_fallthru
          _
        // Predicated region
        $region33: #{artifacts_loss.1} parent=23 // pred_check
          %p286 = pneg %p126
        $region34: #{artifacts_loss.1} parent=23 // pred_check_branch
          %288 = sbr.rel (%p286) target = $region36
        $region35: #{artifacts_loss.1} parent=23 // pred_region
          %s289 = sand.u32 %s116, 1
          %s290 = sand.u32 %s116, 1
          %s291 = smul.addr %s290, 24
          %s292 = scalar_lea.vmem [#allocation5], %s291
          %s293 = smul.addr %s24, 6
          %s294 = sadd.s32 %s25, %s293
          %s295 = smul.addr %s294, 8
          %s296 = scalar_lea.vmem %s3, %s295
          // Predicated region
          $region37: #{artifacts_loss.1} parent=35 // pred_check
            _
          $region38: #{artifacts_loss.1} parent=35 // pred_check_branch
            %298 = sbr.rel (0) target = $region40
          $region39: #{artifacts_loss.1} parent=35 // pred_region
            // Predicated region
            $region41: #{artifacts_loss.1} parent=39 // pred_check
              _
            $region42: #{artifacts_loss.1} parent=39 // pred_check_branch
              %300 = sbr.rel (0) target = $region44
            $region43: #{artifacts_loss.1} parent=39 // pred_region
              // Predicated region
              $region56: #{artifacts_loss.1} parent=43 // pred_check
                _
              $region57: #{artifacts_loss.1} parent=43 // pred_check_branch
                %320 = sbr.rel (0) target = $region59
              $region58: #{artifacts_loss.1} parent=43 // pred_region
                loop: start=0, step=1, limit=1
                $region60: #{artifacts_loss.1} parent=58 // loop_pre_header
                  _
                $region61: #{artifacts_loss.1} parent=58 // loop_header
                  %s322 = sphi 0, %s326
                  %p323 = scmp.ge.s32.totalorder %s322, 1
                  %s327 = sphi %s296, %s296
                  %s328 = sphi %s292, %s292
                $region62: #{artifacts_loss.1} parent=58 // loop_header_branch
                  %325 = sbr.rel (%p323) target = $region66
                $region63: #{artifacts_loss.1} parent=58 // loop_body
                  %v329 = vld [vmem:[%s327] sm:$0xff]
                  %330 = vst [vmem:[%s328] sm:$0xff] %v329
                  %v331 = vld [vmem:[%s327 + $0x10] sm:$0xff]
                  %332 = vst [vmem:[%s328 + $0x8] sm:$0xff] %v331
                  %v333 = vld [vmem:[%s327 + $0x20] sm:$0xff]
                  %334 = vst [vmem:[%s328 + $0x10] sm:$0xff] %v333
                $region64: #{artifacts_loss.1} parent=58 // loop_footer
                  %s326 = sadd.s32 1, %s322
                $region65: #{artifacts_loss.1} parent=58 // loop_footer_branch
                  %321 = sbr.rel target = $region61
                $region66: #{artifacts_loss.1} parent=58 // loop_exit
                  _
              $region59: #{artifacts_loss.1} parent=43 // pred_fallthru
                _
              // Predicated region
              $region67: #{artifacts_loss.1} parent=43 // pred_check
                _
              $region68: #{artifacts_loss.1} parent=43 // pred_check_branch
                %336 = sbr.rel target = $region70
              $region69: #{artifacts_loss.1} parent=43 // pred_region
                _
              $region70: #{artifacts_loss.1} parent=43 // pred_fallthru
                _
            $region44: #{artifacts_loss.1} parent=39 // pred_fallthru
              _
            // Predicated region
            $region45: #{artifacts_loss.1} parent=39 // pred_check
              _
            $region46: #{artifacts_loss.1} parent=39 // pred_check_branch
              %302 = sbr.rel target = $region48
            $region47: #{artifacts_loss.1} parent=39 // pred_region
              %s304 = ssub.s32 256, 1
              loop: start=0, step=1, limit=1
              $region49: #{artifacts_loss.1} parent=47 // loop_pre_header
                _
              $region50: #{artifacts_loss.1} parent=47 // loop_header
                %s306 = sphi 0, %s310
                %p307 = scmp.ge.s32.totalorder %s306, 1
                %s311 = sphi %s296, %s296
                %s312 = sphi %s292, %s292
              $region51: #{artifacts_loss.1} parent=47 // loop_header_branch
                %309 = sbr.rel (%p307) target = $region55
              $region52: #{artifacts_loss.1} parent=47 // loop_body
                %v313 = vld [vmem:[%s311] sm:%s304]
                %314 = vst [vmem:[%s312] sm:%s304] %v313
                %v315 = vld [vmem:[%s311 + $0x10] sm:%s304]
                %316 = vst [vmem:[%s312 + $0x8] sm:%s304] %v315
                %v317 = vld [vmem:[%s311 + $0x20] sm:%s304]
                %318 = vst [vmem:[%s312 + $0x10] sm:%s304] %v317
              $region53: #{artifacts_loss.1} parent=47 // loop_footer
                %s310 = sadd.s32 1, %s306
              $region54: #{artifacts_loss.1} parent=47 // loop_footer_branch
                %305 = sbr.rel target = $region50
              $region55: #{artifacts_loss.1} parent=47 // loop_exit
                _
            $region48: #{artifacts_loss.1} parent=39 // pred_fallthru
              _
          $region40: #{artifacts_loss.1} parent=35 // pred_fallthru
            _
          %337 = vnop
        $region36: #{artifacts_loss.1} parent=23 // pred_fallthru
          _
        // Predicated region
        $region71: #{artifacts_loss.1} parent=23 // pred_check
          %p338 = pneg %p154
        $region72: #{artifacts_loss.1} parent=23 // pred_check_branch
          %340 = sbr.rel (%p338) target = $region74
        $region73: #{artifacts_loss.1} parent=23 // pred_region
          %s341 = sand.u32 %s144, 1
          %s342 = sand.u32 %s144, 1
          %s343 = smul.addr %s342, 24
          %s344 = scalar_lea.vmem [#allocation6], %s343
          %s345 = smul.addr %s24, 6
          %s346 = sadd.s32 %s25, %s345
          %s347 = smul.addr %s346, 8
          %s348 = scalar_lea.vmem %s4, %s347
          // Predicated region
          $region75: #{artifacts_loss.1} parent=73 // pred_check
            _
          $region76: #{artifacts_loss.1} parent=73 // pred_check_branch
            %350 = sbr.rel (0) target = $region78
          $region77: #{artifacts_loss.1} parent=73 // pred_region
            // Predicated region
            $region79: #{artifacts_loss.1} parent=77 // pred_check
              _
            $region80: #{artifacts_loss.1} parent=77 // pred_check_branch
              %352 = sbr.rel (0) target = $region82
            $region81: #{artifacts_loss.1} parent=77 // pred_region
              // Predicated region
              $region94: #{artifacts_loss.1} parent=81 // pred_check
                _
              $region95: #{artifacts_loss.1} parent=81 // pred_check_branch
                %372 = sbr.rel (0) target = $region97
              $region96: #{artifacts_loss.1} parent=81 // pred_region
                loop: start=0, step=1, limit=1
                $region98: #{artifacts_loss.1} parent=96 // loop_pre_header
                  _
                $region99: #{artifacts_loss.1} parent=96 // loop_header
                  %s374 = sphi 0, %s378
                  %p375 = scmp.ge.s32.totalorder %s374, 1
                  %s379 = sphi %s348, %s348
                  %s380 = sphi %s344, %s344
                $region100: #{artifacts_loss.1} parent=96 // loop_header_branch
                  %377 = sbr.rel (%p375) target = $region104
                $region101: #{artifacts_loss.1} parent=96 // loop_body
                  %v381 = vld [vmem:[%s379] sm:$0xff]
                  %382 = vst [vmem:[%s380] sm:$0xff] %v381
                  %v383 = vld [vmem:[%s379 + $0x10] sm:$0xff]
                  %384 = vst [vmem:[%s380 + $0x8] sm:$0xff] %v383
                  %v385 = vld [vmem:[%s379 + $0x20] sm:$0xff]
                  %386 = vst [vmem:[%s380 + $0x10] sm:$0xff] %v385
                $region102: #{artifacts_loss.1} parent=96 // loop_footer
                  %s378 = sadd.s32 1, %s374
                $region103: #{artifacts_loss.1} parent=96 // loop_footer_branch
                  %373 = sbr.rel target = $region99
                $region104: #{artifacts_loss.1} parent=96 // loop_exit
                  _
              $region97: #{artifacts_loss.1} parent=81 // pred_fallthru
                _
              // Predicated region
              $region105: #{artifacts_loss.1} parent=81 // pred_check
                _
              $region106: #{artifacts_loss.1} parent=81 // pred_check_branch
                %388 = sbr.rel target = $region108
              $region107: #{artifacts_loss.1} parent=81 // pred_region
                _
              $region108: #{artifacts_loss.1} parent=81 // pred_fallthru
                _
            $region82: #{artifacts_loss.1} parent=77 // pred_fallthru
              _
            // Predicated region
            $region83: #{artifacts_loss.1} parent=77 // pred_check
              _
            $region84: #{artifacts_loss.1} parent=77 // pred_check_branch
              %354 = sbr.rel target = $region86
            $region85: #{artifacts_loss.1} parent=77 // pred_region
              %s356 = ssub.s32 256, 1
              loop: start=0, step=1, limit=1
              $region87: #{artifacts_loss.1} parent=85 // loop_pre_header
                _
              $region88: #{artifacts_loss.1} parent=85 // loop_header
                %s358 = sphi 0, %s362
                %p359 = scmp.ge.s32.totalorder %s358, 1
                %s363 = sphi %s348, %s348
                %s364 = sphi %s344, %s344
              $region89: #{artifacts_loss.1} parent=85 // loop_header_branch
                %361 = sbr.rel (%p359) target = $region93
              $region90: #{artifacts_loss.1} parent=85 // loop_body
                %v365 = vld [vmem:[%s363] sm:%s356]
                %366 = vst [vmem:[%s364] sm:%s356] %v365
                %v367 = vld [vmem:[%s363 + $0x10] sm:%s356]
                %368 = vst [vmem:[%s364 + $0x8] sm:%s356] %v367
                %v369 = vld [vmem:[%s363 + $0x20] sm:%s356]
                %370 = vst [vmem:[%s364 + $0x10] sm:%s356] %v369
              $region91: #{artifacts_loss.1} parent=85 // loop_footer
                %s362 = sadd.s32 1, %s358
              $region92: #{artifacts_loss.1} parent=85 // loop_footer_branch
                %357 = sbr.rel target = $region88
              $region93: #{artifacts_loss.1} parent=85 // loop_exit
                _
            $region86: #{artifacts_loss.1} parent=77 // pred_fallthru
              _
          $region78: #{artifacts_loss.1} parent=73 // pred_fallthru
            _
          %389 = vnop
        $region74: #{artifacts_loss.1} parent=23 // pred_fallthru
          _
        // Predicated region
        $region109: #{artifacts_loss.1} parent=23 // pred_check
          %p390 = pneg %p180
        $region110: #{artifacts_loss.1} parent=23 // pred_check_branch
          %392 = sbr.rel (%p390) target = $region112
        $region111: #{artifacts_loss.1} parent=23 // pred_region
          %p393 = scmp.lt.s32.totalorder %s25, 1
          %s394 = scalar_select %p393, %s25, 1
          %s395 = smul.addr %s394, 8
          %s396 = scalar_lea.vmem %s5, %s395
        $region112: #{artifacts_loss.1} parent=23 // pred_fallthru
          _
      $region24: #{artifacts_loss.1} parent=5 // pred_fallthru
        _
      %p397 = scmp.le.s32.totalorder 1, %s17
      %p398 = scmp.lt.s32.totalorder %s17, 5
      %p399 = pnand %p397, %p398
      %p400 = pneg %p399
      // Predicated region
      $region113: #{artifacts_loss.1} parent=5 // pred_check
        _
      $region114: #{artifacts_loss.1} parent=5 // pred_check_branch
        %402 = sbr.rel (%p399) target = $region116
      $region115: #{artifacts_loss.1} parent=5 // pred_region
        %s403 = ssub.s32 %s17, 1
        // Predicated region
        $region117: #{artifacts_loss.1} parent=115 // pred_check
          %p404 = pneg %p50
        $region118: #{artifacts_loss.1} parent=115 // pred_check_branch
          %406 = sbr.rel (%p404) target = $region120
        $region119: #{artifacts_loss.1} parent=115 // pred_region
          %408 = dma.done [#allocation4], 32
        $region120: #{artifacts_loss.1} parent=115 // pred_fallthru
          _
        %s409 = sand.u32 %s119, 1
        %s410 = sand.u32 %s119, 1
        %s411 = smul.addr %s410, 24
        %s412 = scalar_lea.vmem [#allocation5], %s411
        // Predicated region
        $region121: #{artifacts_loss.1} parent=115 // pred_check
          %p413 = pneg %p132
        $region122: #{artifacts_loss.1} parent=115 // pred_check_branch
          %415 = sbr.rel (%p413) target = $region124
        $region123: #{artifacts_loss.1} parent=115 // pred_region
          _
        $region124: #{artifacts_loss.1} parent=115 // pred_fallthru
          _
        %s416 = sand.u32 %s147, 1
        %s417 = sand.u32 %s147, 1
        %s418 = smul.addr %s417, 24
        %s419 = scalar_lea.vmem [#allocation6], %s418
        // Predicated region
        $region125: #{artifacts_loss.1} parent=115 // pred_check
          %p420 = pneg %p160
        $region126: #{artifacts_loss.1} parent=115 // pred_check_branch
          %422 = sbr.rel (%p420) target = $region128
        $region127: #{artifacts_loss.1} parent=115 // pred_region
          _
        $region128: #{artifacts_loss.1} parent=115 // pred_fallthru
          _
        %423 = sfence
        %p424 = pneg %p50
        %p425 = pneg %p47
        %p426 = scmp.lt.s32.totalorder %s26, 1
        %s427 = scalar_select %p426, %s26, 1
        %s428 = smul.addr %s427, 2
        %s429 = smul.addr %s428, 8
        %s430 = scalar_lea.vmem %s1, %s429
        %p431 = pneg %p76
        %p432 = pneg %p73
        %p433 = scmp.lt.s32.totalorder %s26, 1
        %s434 = scalar_select %p433, %s26, 1
        %p435 = scmp.lt.s32.totalorder %s27, 1
        %s436 = scalar_select %p435, %s27, 1
        %s437 = smul.addr %s434, 2
        %s438 = sadd.s32 %s436, %s437
        %s439 = smul.addr %s438, 8
        %s440 = scalar_lea.vmem %s2, %s439
        %p441 = pneg %p104
        %p442 = pneg %p101
        %s443 = sand.u32 %s119, 1
        %s444 = sand.u32 %s119, 1
        %s445 = smul.addr %s444, 24
        %s446 = scalar_lea.vmem [#allocation5], %s445
        %p447 = pneg %p132
        %p448 = pneg %p129
        %s449 = sand.u32 %s147, 1
        %s450 = sand.u32 %s147, 1
        %s451 = smul.addr %s450, 24
        %s452 = scalar_lea.vmem [#allocation6], %s451
        %p453 = pneg %p160
        %p454 = pneg %p157
        %p455 = scmp.lt.s32.totalorder %s27, 1
        %s456 = scalar_select %p455, %s27, 1
        %s457 = smul.addr %s456, 8
        %s458 = scalar_lea.vmem %s5, %s457
        %p459 = pneg %p186
        %p460 = pneg %p183
        %p461 = pneg %p207
        %p462 = pneg %p204
        %p463 = pneg %p235
        %p464 = pneg %p232
        %s465 = sand.u32 %s222, 1
        %s466 = scalar_lea.sflag [#allocation3], %s465
        %s467 = sand.u32 %s222, 1
        %s468 = smul.addr %s467, 24
        %s469 = scalar_lea.vmem [#allocation7], %s468
        %p470 = scmp.lt.s32.totalorder %s26, 1
        %s471 = scalar_select %p470, %s26, 1
        %s472 = smul.addr %s471, 2
        %s473 = smul.addr %s472, 8
        %s474 = scalar_lea.vmem %s1, %s473
        %p475 = scmp.lt.s32.totalorder %s26, 1
        %s476 = scalar_select %p475, %s26, 1
        %p477 = scmp.lt.s32.totalorder %s27, 1
        %s478 = scalar_select %p477, %s27, 1
        %s479 = smul.addr %s476, 2
        %s480 = sadd.s32 %s478, %s479
        %s481 = smul.addr %s480, 8
        %s482 = scalar_lea.vmem %s2, %s481
        %p483 = scmp.lt.s32.totalorder %s27, 1
        %s484 = scalar_select %p483, %s27, 1
        %s485 = smul.addr %s484, 8
        %s486 = scalar_lea.vmem %s5, %s485
        %s487 = smul.u32 %s26, 128
        %s488 = sld [smem:[#allocation2 + %s487]]
        %s489 = sadd.s32 %s487, 1
        %s490 = sld [smem:[#allocation2 + %s489]]
        %v491 = vld [vmem:[%s474] sm:$0xff]
        %v492 = vld [vmem:[%s474 + $0x8] sm:$0xff]
        %v493 = vstv %s488
        %v494 = vsub.f32 %v491, %v493
        %v495 = vsub.f32 %v492, %v493
        %v496 = vmul.f32 %v494, %v494
        %v497 = vmul.f32 %v495, %v495
        %v498 = vld [vmem:[%s486] sm:$0xff]
        %v499 = vld [vmem:[%s6] sm:$0xff]
        %v500 = vld [vmem:[%s6 + $0x8] sm:$0xff]
        %vm501 = vcmask 130048
        %v503 = vsel %vm501, %v498, 0
        %505 = vmatpush.msra.mxu0 0.0
        %506 = vmatpush.msra.mxu0 0.0
        %507 = vmatpush.msra.mxu0 0.0
        %508 = vmatpush.msra.mxu0 0.0
        %509 = vmatpush.msra.mxu0 0.0
        %510 = vmatpush.msra.mxu0 0.0
        %511 = vmatpush.msra.mxu0 0.0
        %512 = vmatpush.msra.mxu0 0.0
        %513 = vmatpush.msra.mxu0 0.0
        %514 = vmatpush.msra.mxu0 0.0
        %515 = vmatpush.msra.mxu0 0.0
        %516 = vmatpush.msra.mxu0 0.0
        %517 = vmatpush.msra.mxu0 0.0
        %518 = vmatpush.msra.mxu0 0.0
        %v519 = vand.u32 %v495, 4294901760
        %520 = vmatpush.msra.mxu0 %v519
        %v521 = vand.u32 %v494, 4294901760
        %522 = vmatpush.msra.mxu0 %v521
        %v523 = vand.u32 %v503, 4294901760
        %v524 = vsub.f32 %v503, %v523
        %v525 = vand.u32 %v524, 4294901760
        %v526 = vsub.f32 %v524, %v525
        %v527 = vand.u32 %v526, 4294901760
        %528 = vmatmul.f32.gmra.mxu0 %v527
        %v529 = vpop.f32.mrf.mxu0
        %v530 = vadd.f32 0.0, %v529
        %531 = vdwg.mxu0
        %532 = vmatpush.msra.mxu0 0.0
        %533 = vmatpush.msra.mxu0 0.0
        %534 = vmatpush.msra.mxu0 0.0
        %535 = vmatpush.msra.mxu0 0.0
        %536 = vmatpush.msra.mxu0 0.0
        %537 = vmatpush.msra.mxu0 0.0
        %538 = vmatpush.msra.mxu0 0.0
        %539 = vmatpush.msra.mxu0 0.0
        %540 = vmatpush.msra.mxu0 0.0
        %541 = vmatpush.msra.mxu0 0.0
        %542 = vmatpush.msra.mxu0 0.0
        %543 = vmatpush.msra.mxu0 0.0
        %544 = vmatpush.msra.mxu0 0.0
        %545 = vmatpush.msra.mxu0 0.0
        %v546 = vand.u32 %v495, 4294901760
        %v547 = vsub.f32 %v495, %v546
        %v548 = vand.u32 %v547, 4294901760
        %v549 = vsub.f32 %v547, %v548
        %v550 = vand.u32 %v549, 4294901760
        %551 = vmatpush.msra.mxu0 %v550
        %v552 = vand.u32 %v494, 4294901760
        %v553 = vsub.f32 %v494, %v552
        %v554 = vand.u32 %v553, 4294901760
        %v555 = vsub.f32 %v553, %v554
        %v556 = vand.u32 %v555, 4294901760
        %557 = vmatpush.msra.mxu0 %v556
        %v558 = vand.u32 %v503, 4294901760
        %559 = vmatmul.f32.gmra.mxu0 %v558
        %v560 = vpop.f32.mrf.mxu0
        %v561 = vadd.f32 %v530, %v560
        %562 = vdwg.mxu0
        %563 = vmatpush.msra.mxu0 0.0
        %564 = vmatpush.msra.mxu0 0.0
        %565 = vmatpush.msra.mxu0 0.0
        %566 = vmatpush.msra.mxu0 0.0
        %567 = vmatpush.msra.mxu0 0.0
        %568 = vmatpush.msra.mxu0 0.0
        %569 = vmatpush.msra.mxu0 0.0
        %570 = vmatpush.msra.mxu0 0.0
        %571 = vmatpush.msra.mxu0 0.0
        %572 = vmatpush.msra.mxu0 0.0
        %573 = vmatpush.msra.mxu0 0.0
        %574 = vmatpush.msra.mxu0 0.0
        %575 = vmatpush.msra.mxu0 0.0
        %576 = vmatpush.msra.mxu0 0.0
        %v577 = vand.u32 %v495, 4294901760
        %v578 = vsub.f32 %v495, %v577
        %579 = vmatpush.msra.mxu0 %v578
        %v580 = vand.u32 %v494, 4294901760
        %v581 = vsub.f32 %v494, %v580
        %582 = vmatpush.msra.mxu0 %v581
        %v583 = vand.u32 %v503, 4294901760
        %v584 = vsub.f32 %v503, %v583
        %585 = vmatmul.f32.gmra.mxu0 %v584
        %v586 = vpop.f32.mrf.mxu0
        %v587 = vadd.f32 %v561, %v586
        %588 = vdwg.mxu0
        %589 = vmatpush.msra.mxu0 0.0
        %590 = vmatpush.msra.mxu0 0.0
        %591 = vmatpush.msra.mxu0 0.0
        %592 = vmatpush.msra.mxu0 0.0
        %593 = vmatpush.msra.mxu0 0.0
        %594 = vmatpush.msra.mxu0 0.0
        %595 = vmatpush.msra.mxu0 0.0
        %596 = vmatpush.msra.mxu0 0.0
        %597 = vmatpush.msra.mxu0 0.0
        %598 = vmatpush.msra.mxu0 0.0
        %599 = vmatpush.msra.mxu0 0.0
        %600 = vmatpush.msra.mxu0 0.0
        %601 = vmatpush.msra.mxu0 0.0
        %602 = vmatpush.msra.mxu0 0.0
        %v603 = vand.u32 %v495, 4294901760
        %604 = vmatpush.msra.mxu0 %v603
        %v605 = vand.u32 %v494, 4294901760
        %606 = vmatpush.msra.mxu0 %v605
        %v607 = vand.u32 %v503, 4294901760
        %v608 = vsub.f32 %v503, %v607
        %v609 = vand.u32 %v608, 4294901760
        %610 = vmatmul.f32.gmra.mxu0 %v609
        %v611 = vpop.f32.mrf.mxu0
        %v612 = vadd.f32 %v587, %v611
        %613 = vdwg.mxu0
        %614 = vmatpush.msra.mxu0 0.0
        %615 = vmatpush.msra.mxu0 0.0
        %616 = vmatpush.msra.mxu0 0.0
        %617 = vmatpush.msra.mxu0 0.0
        %618 = vmatpush.msra.mxu0 0.0
        %619 = vmatpush.msra.mxu0 0.0
        %620 = vmatpush.msra.mxu0 0.0
        %621 = vmatpush.msra.mxu0 0.0
        %622 = vmatpush.msra.mxu0 0.0
        %623 = vmatpush.msra.mxu0 0.0
        %624 = vmatpush.msra.mxu0 0.0
        %625 = vmatpush.msra.mxu0 0.0
        %626 = vmatpush.msra.mxu0 0.0
        %627 = vmatpush.msra.mxu0 0.0
        %v628 = vand.u32 %v495, 4294901760
        %v629 = vsub.f32 %v495, %v628
        %v630 = vand.u32 %v629, 4294901760
        %631 = vmatpush.msra.mxu0 %v630
        %v632 = vand.u32 %v494, 4294901760
        %v633 = vsub.f32 %v494, %v632
        %v634 = vand.u32 %v633, 4294901760
        %635 = vmatpush.msra.mxu0 %v634
        %v636 = vand.u32 %v503, 4294901760
        %637 = vmatmul.f32.gmra.mxu0 %v636
        %v638 = vpop.f32.mrf.mxu0
        %v639 = vadd.f32 %v612, %v638
        %640 = vdwg.mxu0
        %641 = vmatpush.msra.mxu0 0.0
        %642 = vmatpush.msra.mxu0 0.0
        %643 = vmatpush.msra.mxu0 0.0
        %644 = vmatpush.msra.mxu0 0.0
        %645 = vmatpush.msra.mxu0 0.0
        %646 = vmatpush.msra.mxu0 0.0
        %647 = vmatpush.msra.mxu0 0.0
        %648 = vmatpush.msra.mxu0 0.0
        %649 = vmatpush.msra.mxu0 0.0
        %650 = vmatpush.msra.mxu0 0.0
        %651 = vmatpush.msra.mxu0 0.0
        %652 = vmatpush.msra.mxu0 0.0
        %653 = vmatpush.msra.mxu0 0.0
        %654 = vmatpush.msra.mxu0 0.0
        %v655 = vand.u32 %v495, 4294901760
        %656 = vmatpush.msra.mxu0 %v655
        %v657 = vand.u32 %v494, 4294901760
        %658 = vmatpush.msra.mxu0 %v657
        %v659 = vand.u32 %v503, 4294901760
        %660 = vmatmul.f32.gmra.mxu0 %v659
        %v661 = vpop.f32.mrf.mxu0
        %v662 = vadd.f32 %v639, %v661
        %663 = vdwg.mxu0
        %664 = vmatpush.msra.mxu0 0.0
        %665 = vmatpush.msra.mxu0 0.0
        %666 = vmatpush.msra.mxu0 0.0
        %667 = vmatpush.msra.mxu0 0.0
        %668 = vmatpush.msra.mxu0 0.0
        %669 = vmatpush.msra.mxu0 0.0
        %670 = vmatpush.msra.mxu0 0.0
        %671 = vmatpush.msra.mxu0 0.0
        %672 = vmatpush.msra.mxu0 0.0
        %673 = vmatpush.msra.mxu0 0.0
        %674 = vmatpush.msra.mxu0 0.0
        %675 = vmatpush.msra.mxu0 0.0
        %676 = vmatpush.msra.mxu0 0.0
        %677 = vmatpush.msra.mxu0 0.0
        %v678 = vand.u32 %v497, 4294901760
        %679 = vmatpush.msra.mxu0 %v678
        %v680 = vand.u32 %v496, 4294901760
        %681 = vmatpush.msra.mxu0 %v680
        %v682 = vand.u32 %v503, 4294901760
        %v683 = vsub.f32 %v503, %v682
        %v684 = vand.u32 %v683, 4294901760
        %v685 = vsub.f32 %v683, %v684
        %v686 = vand.u32 %v685, 4294901760
        %687 = vmatmul.f32.gmra.mxu0 %v686
        %v688 = vpop.f32.mrf.mxu0
        %v689 = vadd.f32 0.0, %v688
        %690 = vdwg.mxu0
        %691 = vmatpush.msra.mxu0 0.0
        %692 = vmatpush.msra.mxu0 0.0
        %693 = vmatpush.msra.mxu0 0.0
        %694 = vmatpush.msra.mxu0 0.0
        %695 = vmatpush.msra.mxu0 0.0
        %696 = vmatpush.msra.mxu0 0.0
        %697 = vmatpush.msra.mxu0 0.0
        %698 = vmatpush.msra.mxu0 0.0
        %699 = vmatpush.msra.mxu0 0.0
        %700 = vmatpush.msra.mxu0 0.0
        %701 = vmatpush.msra.mxu0 0.0
        %702 = vmatpush.msra.mxu0 0.0
        %703 = vmatpush.msra.mxu0 0.0
        %704 = vmatpush.msra.mxu0 0.0
        %v705 = vand.u32 %v497, 4294901760
        %v706 = vsub.f32 %v497, %v705
        %v707 = vand.u32 %v706, 4294901760
        %v708 = vsub.f32 %v706, %v707
        %v709 = vand.u32 %v708, 4294901760
        %710 = vmatpush.msra.mxu0 %v709
        %v711 = vand.u32 %v496, 4294901760
        %v712 = vsub.f32 %v496, %v711
        %v713 = vand.u32 %v712, 4294901760
        %v714 = vsub.f32 %v712, %v713
        %v715 = vand.u32 %v714, 4294901760
        %716 = vmatpush.msra.mxu0 %v715
        %v717 = vand.u32 %v503, 4294901760
        %718 = vmatmul.f32.gmra.mxu0 %v717
        %v719 = vpop.f32.mrf.mxu0
        %v720 = vadd.f32 %v689, %v719
        %721 = vdwg.mxu0
        %722 = vmatpush.msra.mxu0 0.0
        %723 = vmatpush.msra.mxu0 0.0
        %724 = vmatpush.msra.mxu0 0.0
        %725 = vmatpush.msra.mxu0 0.0
        %726 = vmatpush.msra.mxu0 0.0
        %727 = vmatpush.msra.mxu0 0.0
        %728 = vmatpush.msra.mxu0 0.0
        %729 = vmatpush.msra.mxu0 0.0
        %730 = vmatpush.msra.mxu0 0.0
        %731 = vmatpush.msra.mxu0 0.0
        %732 = vmatpush.msra.mxu0 0.0
        %733 = vmatpush.msra.mxu0 0.0
        %734 = vmatpush.msra.mxu0 0.0
        %735 = vmatpush.msra.mxu0 0.0
        %v736 = vand.u32 %v497, 4294901760
        %v737 = vsub.f32 %v497, %v736
        %738 = vmatpush.msra.mxu0 %v737
        %v739 = vand.u32 %v496, 4294901760
        %v740 = vsub.f32 %v496, %v739
        %741 = vmatpush.msra.mxu0 %v740
        %v742 = vand.u32 %v503, 4294901760
        %v743 = vsub.f32 %v503, %v742
        %744 = vmatmul.f32.gmra.mxu0 %v743
        %v745 = vpop.f32.mrf.mxu0
        %v746 = vadd.f32 %v720, %v745
        %747 = vdwg.mxu0
        %748 = vmatpush.msra.mxu0 0.0
        %749 = vmatpush.msra.mxu0 0.0
        %750 = vmatpush.msra.mxu0 0.0
        %751 = vmatpush.msra.mxu0 0.0
        %752 = vmatpush.msra.mxu0 0.0
        %753 = vmatpush.msra.mxu0 0.0
        %754 = vmatpush.msra.mxu0 0.0
        %755 = vmatpush.msra.mxu0 0.0
        %756 = vmatpush.msra.mxu0 0.0
        %757 = vmatpush.msra.mxu0 0.0
        %758 = vmatpush.msra.mxu0 0.0
        %759 = vmatpush.msra.mxu0 0.0
        %760 = vmatpush.msra.mxu0 0.0
        %761 = vmatpush.msra.mxu0 0.0
        %v762 = vand.u32 %v497, 4294901760
        %763 = vmatpush.msra.mxu0 %v762
        %v764 = vand.u32 %v496, 4294901760
        %765 = vmatpush.msra.mxu0 %v764
        %v766 = vand.u32 %v503, 4294901760
        %v767 = vsub.f32 %v503, %v766
        %v768 = vand.u32 %v767, 4294901760
        %769 = vmatmul.f32.gmra.mxu0 %v768
        %v770 = vpop.f32.mrf.mxu0
        %v771 = vadd.f32 %v746, %v770
        %772 = vdwg.mxu0
        %773 = vmatpush.msra.mxu0 0.0
        %774 = vmatpush.msra.mxu0 0.0
        %775 = vmatpush.msra.mxu0 0.0
        %776 = vmatpush.msra.mxu0 0.0
        %777 = vmatpush.msra.mxu0 0.0
        %778 = vmatpush.msra.mxu0 0.0
        %779 = vmatpush.msra.mxu0 0.0
        %780 = vmatpush.msra.mxu0 0.0
        %781 = vmatpush.msra.mxu0 0.0
        %782 = vmatpush.msra.mxu0 0.0
        %783 = vmatpush.msra.mxu0 0.0
        %784 = vmatpush.msra.mxu0 0.0
        %785 = vmatpush.msra.mxu0 0.0
        %786 = vmatpush.msra.mxu0 0.0
        %v787 = vand.u32 %v497, 4294901760
        %v788 = vsub.f32 %v497, %v787
        %v789 = vand.u32 %v788, 4294901760
        %790 = vmatpush.msra.mxu0 %v789
        %v791 = vand.u32 %v496, 4294901760
        %v792 = vsub.f32 %v496, %v791
        %v793 = vand.u32 %v792, 4294901760
        %794 = vmatpush.msra.mxu0 %v793
        %v795 = vand.u32 %v503, 4294901760
        %796 = vmatmul.f32.gmra.mxu0 %v795
        %v797 = vpop.f32.mrf.mxu0
        %v798 = vadd.f32 %v771, %v797
        %799 = vdwg.mxu0
        %800 = vmatpush.msra.mxu0 0.0
        %801 = vmatpush.msra.mxu0 0.0
        %802 = vmatpush.msra.mxu0 0.0
        %803 = vmatpush.msra.mxu0 0.0
        %804 = vmatpush.msra.mxu0 0.0
        %805 = vmatpush.msra.mxu0 0.0
        %806 = vmatpush.msra.mxu0 0.0
        %807 = vmatpush.msra.mxu0 0.0
        %808 = vmatpush.msra.mxu0 0.0
        %809 = vmatpush.msra.mxu0 0.0
        %810 = vmatpush.msra.mxu0 0.0
        %811 = vmatpush.msra.mxu0 0.0
        %812 = vmatpush.msra.mxu0 0.0
        %813 = vmatpush.msra.mxu0 0.0
        %v814 = vand.u32 %v497, 4294901760
        %815 = vmatpush.msra.mxu0 %v814
        %v816 = vand.u32 %v496, 4294901760
        %817 = vmatpush.msra.mxu0 %v816
        %v818 = vand.u32 %v503, 4294901760
        %819 = vmatmul.f32.gmra.mxu0 %v818
        %v820 = vpop.f32.mrf.mxu0
        %v821 = vadd.f32 %v798, %v820
        %822 = vdwg.mxu0
        %v824 = vsel %vm501, %v662, 0
        %826 = vmatpush.msra.mxu0 0.0
        %827 = vmatpush.msra.mxu0 0.0
        %828 = vmatpush.msra.mxu0 0.0
        %829 = vmatpush.msra.mxu0 0.0
        %830 = vmatpush.msra.mxu0 0.0
        %831 = vmatpush.msra.mxu0 0.0
        %832 = vmatpush.msra.mxu0 0.0
        %833 = vmatpush.msra.mxu0 0.0
        %834 = vmatpush.msra.mxu0 0.0
        %835 = vmatpush.msra.mxu0 0.0
        %836 = vmatpush.msra.mxu0 0.0
        %837 = vmatpush.msra.mxu0 0.0
        %838 = vmatpush.msra.mxu0 0.0
        %839 = vmatpush.msra.mxu0 0.0
        %v840 = vand.u32 %v500, 4294901760
        %841 = vmatpush.msra.mxu0 %v840
        %v842 = vand.u32 %v499, 4294901760
        %843 = vmatpush.msra.mxu0 %v842
        %v844 = vand.u32 %v824, 4294901760
        %v845 = vsub.f32 %v824, %v844
        %v846 = vand.u32 %v845, 4294901760
        %v847 = vsub.f32 %v845, %v846
        %v848 = vand.u32 %v847, 4294901760
        %849 = vmatmul.f32.gmra.mxu0 %v848
        %v850 = vpop.f32.mrf.mxu0
        %v851 = vadd.f32 0.0, %v850
        %852 = vdwg.mxu0
        %853 = vmatpush.msra.mxu0 0.0
        %854 = vmatpush.msra.mxu0 0.0
        %855 = vmatpush.msra.mxu0 0.0
        %856 = vmatpush.msra.mxu0 0.0
        %857 = vmatpush.msra.mxu0 0.0
        %858 = vmatpush.msra.mxu0 0.0
        %859 = vmatpush.msra.mxu0 0.0
        %860 = vmatpush.msra.mxu0 0.0
        %861 = vmatpush.msra.mxu0 0.0
        %862 = vmatpush.msra.mxu0 0.0
        %863 = vmatpush.msra.mxu0 0.0
        %864 = vmatpush.msra.mxu0 0.0
        %865 = vmatpush.msra.mxu0 0.0
        %866 = vmatpush.msra.mxu0 0.0
        %v867 = vand.u32 %v500, 4294901760
        %v868 = vsub.f32 %v500, %v867
        %v869 = vand.u32 %v868, 4294901760
        %v870 = vsub.f32 %v868, %v869
        %v871 = vand.u32 %v870, 4294901760
        %872 = vmatpush.msra.mxu0 %v871
        %v873 = vand.u32 %v499, 4294901760
        %v874 = vsub.f32 %v499, %v873
        %v875 = vand.u32 %v874, 4294901760
        %v876 = vsub.f32 %v874, %v875
        %v877 = vand.u32 %v876, 4294901760
        %878 = vmatpush.msra.mxu0 %v877
        %v879 = vand.u32 %v824, 4294901760
        %880 = vmatmul.f32.gmra.mxu0 %v879
        %v881 = vpop.f32.mrf.mxu0
        %v882 = vadd.f32 %v851, %v881
        %883 = vdwg.mxu0
        %884 = vmatpush.msra.mxu0 0.0
        %885 = vmatpush.msra.mxu0 0.0
        %886 = vmatpush.msra.mxu0 0.0
        %887 = vmatpush.msra.mxu0 0.0
        %888 = vmatpush.msra.mxu0 0.0
        %889 = vmatpush.msra.mxu0 0.0
        %890 = vmatpush.msra.mxu0 0.0
        %891 = vmatpush.msra.mxu0 0.0
        %892 = vmatpush.msra.mxu0 0.0
        %893 = vmatpush.msra.mxu0 0.0
        %894 = vmatpush.msra.mxu0 0.0
        %895 = vmatpush.msra.mxu0 0.0
        %896 = vmatpush.msra.mxu0 0.0
        %897 = vmatpush.msra.mxu0 0.0
        %v898 = vand.u32 %v500, 4294901760
        %v899 = vsub.f32 %v500, %v898
        %900 = vmatpush.msra.mxu0 %v899
        %v901 = vand.u32 %v499, 4294901760
        %v902 = vsub.f32 %v499, %v901
        %903 = vmatpush.msra.mxu0 %v902
        %v904 = vand.u32 %v824, 4294901760
        %v905 = vsub.f32 %v824, %v904
        %906 = vmatmul.f32.gmra.mxu0 %v905
        %v907 = vpop.f32.mrf.mxu0
        %v908 = vadd.f32 %v882, %v907
        %909 = vdwg.mxu0
        %910 = vmatpush.msra.mxu0 0.0
        %911 = vmatpush.msra.mxu0 0.0
        %912 = vmatpush.msra.mxu0 0.0
        %913 = vmatpush.msra.mxu0 0.0
        %914 = vmatpush.msra.mxu0 0.0
        %915 = vmatpush.msra.mxu0 0.0
        %916 = vmatpush.msra.mxu0 0.0
        %917 = vmatpush.msra.mxu0 0.0
        %918 = vmatpush.msra.mxu0 0.0
        %919 = vmatpush.msra.mxu0 0.0
        %920 = vmatpush.msra.mxu0 0.0
        %921 = vmatpush.msra.mxu0 0.0
        %922 = vmatpush.msra.mxu0 0.0
        %923 = vmatpush.msra.mxu0 0.0
        %v924 = vand.u32 %v500, 4294901760
        %925 = vmatpush.msra.mxu0 %v924
        %v926 = vand.u32 %v499, 4294901760
        %927 = vmatpush.msra.mxu0 %v926
        %v928 = vand.u32 %v824, 4294901760
        %v929 = vsub.f32 %v824, %v928
        %v930 = vand.u32 %v929, 4294901760
        %931 = vmatmul.f32.gmra.mxu0 %v930
        %v932 = vpop.f32.mrf.mxu0
        %v933 = vadd.f32 %v908, %v932
        %934 = vdwg.mxu0
        %935 = vmatpush.msra.mxu0 0.0
        %936 = vmatpush.msra.mxu0 0.0
        %937 = vmatpush.msra.mxu0 0.0
        %938 = vmatpush.msra.mxu0 0.0
        %939 = vmatpush.msra.mxu0 0.0
        %940 = vmatpush.msra.mxu0 0.0
        %941 = vmatpush.msra.mxu0 0.0
        %942 = vmatpush.msra.mxu0 0.0
        %943 = vmatpush.msra.mxu0 0.0
        %944 = vmatpush.msra.mxu0 0.0
        %945 = vmatpush.msra.mxu0 0.0
        %946 = vmatpush.msra.mxu0 0.0
        %947 = vmatpush.msra.mxu0 0.0
        %948 = vmatpush.msra.mxu0 0.0
        %v949 = vand.u32 %v500, 4294901760
        %v950 = vsub.f32 %v500, %v949
        %v951 = vand.u32 %v950, 4294901760
        %952 = vmatpush.msra.mxu0 %v951
        %v953 = vand.u32 %v499, 4294901760
        %v954 = vsub.f32 %v499, %v953
        %v955 = vand.u32 %v954, 4294901760
        %956 = vmatpush.msra.mxu0 %v955
        %v957 = vand.u32 %v824, 4294901760
        %958 = vmatmul.f32.gmra.mxu0 %v957
        %v959 = vpop.f32.mrf.mxu0
        %v960 = vadd.f32 %v933, %v959
        %961 = vdwg.mxu0
        %962 = vmatpush.msra.mxu0 0.0
        %963 = vmatpush.msra.mxu0 0.0
        %964 = vmatpush.msra.mxu0 0.0
        %965 = vmatpush.msra.mxu0 0.0
        %966 = vmatpush.msra.mxu0 0.0
        %967 = vmatpush.msra.mxu0 0.0
        %968 = vmatpush.msra.mxu0 0.0
        %969 = vmatpush.msra.mxu0 0.0
        %970 = vmatpush.msra.mxu0 0.0
        %971 = vmatpush.msra.mxu0 0.0
        %972 = vmatpush.msra.mxu0 0.0
        %973 = vmatpush.msra.mxu0 0.0
        %974 = vmatpush.msra.mxu0 0.0
        %975 = vmatpush.msra.mxu0 0.0
        %v976 = vand.u32 %v500, 4294901760
        %977 = vmatpush.msra.mxu0 %v976
        %v978 = vand.u32 %v499, 4294901760
        %979 = vmatpush.msra.mxu0 %v978
        %v980 = vand.u32 %v824, 4294901760
        %981 = vmatmul.f32.gmra.mxu0 %v980
        %v982 = vpop.f32.mrf.mxu0
        %v983 = vadd.f32 %v960, %v982
        %984 = vdwg.mxu0
        %v986 = vsel %vm501, %v821, 0
        %988 = vmatpush.msra.mxu0 0.0
        %989 = vmatpush.msra.mxu0 0.0
        %990 = vmatpush.msra.mxu0 0.0
        %991 = vmatpush.msra.mxu0 0.0
        %992 = vmatpush.msra.mxu0 0.0
        %993 = vmatpush.msra.mxu0 0.0
        %994 = vmatpush.msra.mxu0 0.0
        %995 = vmatpush.msra.mxu0 0.0
        %996 = vmatpush.msra.mxu0 0.0
        %997 = vmatpush.msra.mxu0 0.0
        %998 = vmatpush.msra.mxu0 0.0
        %999 = vmatpush.msra.mxu0 0.0
        %1000 = vmatpush.msra.mxu0 0.0
        %1001 = vmatpush.msra.mxu0 0.0
        %v1002 = vand.u32 %v500, 4294901760
        %1003 = vmatpush.msra.mxu0 %v1002
        %v1004 = vand.u32 %v499, 4294901760
        %1005 = vmatpush.msra.mxu0 %v1004
        %v1006 = vand.u32 %v986, 4294901760
        %v1007 = vsub.f32 %v986, %v1006
        %v1008 = vand.u32 %v1007, 4294901760
        %v1009 = vsub.f32 %v1007, %v1008
        %v1010 = vand.u32 %v1009, 4294901760
        %1011 = vmatmul.f32.gmra.mxu0 %v1010
        %v1012 = vpop.f32.mrf.mxu0
        %v1013 = vadd.f32 0.0, %v1012
        %1014 = vdwg.mxu0
        %1015 = vmatpush.msra.mxu0 0.0
        %1016 = vmatpush.msra.mxu0 0.0
        %1017 = vmatpush.msra.mxu0 0.0
        %1018 = vmatpush.msra.mxu0 0.0
        %1019 = vmatpush.msra.mxu0 0.0
        %1020 = vmatpush.msra.mxu0 0.0
        %1021 = vmatpush.msra.mxu0 0.0
        %1022 = vmatpush.msra.mxu0 0.0
        %1023 = vmatpush.msra.mxu0 0.0
        %1024 = vmatpush.msra.mxu0 0.0
        %1025 = vmatpush.msra.mxu0 0.0
        %1026 = vmatpush.msra.mxu0 0.0
        %1027 = vmatpush.msra.mxu0 0.0
        %1028 = vmatpush.msra.mxu0 0.0
        %v1029 = vand.u32 %v500, 4294901760
        %v1030 = vsub.f32 %v500, %v1029
        %v1031 = vand.u32 %v1030, 4294901760
        %v1032 = vsub.f32 %v1030, %v1031
        %v1033 = vand.u32 %v1032, 4294901760
        %1034 = vmatpush.msra.mxu0 %v1033
        %v1035 = vand.u32 %v499, 4294901760
        %v1036 = vsub.f32 %v499, %v1035
        %v1037 = vand.u32 %v1036, 4294901760
        %v1038 = vsub.f32 %v1036, %v1037
        %v1039 = vand.u32 %v1038, 4294901760
        %1040 = vmatpush.msra.mxu0 %v1039
        %v1041 = vand.u32 %v986, 4294901760
        %1042 = vmatmul.f32.gmra.mxu0 %v1041
        %v1043 = vpop.f32.mrf.mxu0
        %v1044 = vadd.f32 %v1013, %v1043
        %1045 = vdwg.mxu0
        %1046 = vmatpush.msra.mxu0 0.0
        %1047 = vmatpush.msra.mxu0 0.0
        %1048 = vmatpush.msra.mxu0 0.0
        %1049 = vmatpush.msra.mxu0 0.0
        %1050 = vmatpush.msra.mxu0 0.0
        %1051 = vmatpush.msra.mxu0 0.0
        %1052 = vmatpush.msra.mxu0 0.0
        %1053 = vmatpush.msra.mxu0 0.0
        %1054 = vmatpush.msra.mxu0 0.0
        %1055 = vmatpush.msra.mxu0 0.0
        %1056 = vmatpush.msra.mxu0 0.0
        %1057 = vmatpush.msra.mxu0 0.0
        %1058 = vmatpush.msra.mxu0 0.0
        %1059 = vmatpush.msra.mxu0 0.0
        %v1060 = vand.u32 %v500, 4294901760
        %v1061 = vsub.f32 %v500, %v1060
        %1062 = vmatpush.msra.mxu0 %v1061
        %v1063 = vand.u32 %v499, 4294901760
        %v1064 = vsub.f32 %v499, %v1063
        %1065 = vmatpush.msra.mxu0 %v1064
        %v1066 = vand.u32 %v986, 4294901760
        %v1067 = vsub.f32 %v986, %v1066
        %1068 = vmatmul.f32.gmra.mxu0 %v1067
        %v1069 = vpop.f32.mrf.mxu0
        %v1070 = vadd.f32 %v1044, %v1069
        %1071 = vdwg.mxu0
        %1072 = vmatpush.msra.mxu0 0.0
        %1073 = vmatpush.msra.mxu0 0.0
        %1074 = vmatpush.msra.mxu0 0.0
        %1075 = vmatpush.msra.mxu0 0.0
        %1076 = vmatpush.msra.mxu0 0.0
        %1077 = vmatpush.msra.mxu0 0.0
        %1078 = vmatpush.msra.mxu0 0.0
        %1079 = vmatpush.msra.mxu0 0.0
        %1080 = vmatpush.msra.mxu0 0.0
        %1081 = vmatpush.msra.mxu0 0.0
        %1082 = vmatpush.msra.mxu0 0.0
        %1083 = vmatpush.msra.mxu0 0.0
        %1084 = vmatpush.msra.mxu0 0.0
        %1085 = vmatpush.msra.mxu0 0.0
        %v1086 = vand.u32 %v500, 4294901760
        %1087 = vmatpush.msra.mxu0 %v1086
        %v1088 = vand.u32 %v499, 4294901760
        %1089 = vmatpush.msra.mxu0 %v1088
        %v1090 = vand.u32 %v986, 4294901760
        %v1091 = vsub.f32 %v986, %v1090
        %v1092 = vand.u32 %v1091, 4294901760
        %1093 = vmatmul.f32.gmra.mxu0 %v1092
        %v1094 = vpop.f32.mrf.mxu0
        %v1095 = vadd.f32 %v1070, %v1094
        %1096 = vdwg.mxu0
        %1097 = vmatpush.msra.mxu0 0.0
        %1098 = vmatpush.msra.mxu0 0.0
        %1099 = vmatpush.msra.mxu0 0.0
        %1100 = vmatpush.msra.mxu0 0.0
        %1101 = vmatpush.msra.mxu0 0.0
        %1102 = vmatpush.msra.mxu0 0.0
        %1103 = vmatpush.msra.mxu0 0.0
        %1104 = vmatpush.msra.mxu0 0.0
        %1105 = vmatpush.msra.mxu0 0.0
        %1106 = vmatpush.msra.mxu0 0.0
        %1107 = vmatpush.msra.mxu0 0.0
        %1108 = vmatpush.msra.mxu0 0.0
        %1109 = vmatpush.msra.mxu0 0.0
        %1110 = vmatpush.msra.mxu0 0.0
        %v1111 = vand.u32 %v500, 4294901760
        %v1112 = vsub.f32 %v500, %v1111
        %v1113 = vand.u32 %v1112, 4294901760
        %1114 = vmatpush.msra.mxu0 %v1113
        %v1115 = vand.u32 %v499, 4294901760
        %v1116 = vsub.f32 %v499, %v1115
        %v1117 = vand.u32 %v1116, 4294901760
        %1118 = vmatpush.msra.mxu0 %v1117
        %v1119 = vand.u32 %v986, 4294901760
        %1120 = vmatmul.f32.gmra.mxu0 %v1119
        %v1121 = vpop.f32.mrf.mxu0
        %v1122 = vadd.f32 %v1095, %v1121
        %1123 = vdwg.mxu0
        %1124 = vmatpush.msra.mxu0 0.0
        %1125 = vmatpush.msra.mxu0 0.0
        %1126 = vmatpush.msra.mxu0 0.0
        %1127 = vmatpush.msra.mxu0 0.0
        %1128 = vmatpush.msra.mxu0 0.0
        %1129 = vmatpush.msra.mxu0 0.0
        %1130 = vmatpush.msra.mxu0 0.0
        %1131 = vmatpush.msra.mxu0 0.0
        %1132 = vmatpush.msra.mxu0 0.0
        %1133 = vmatpush.msra.mxu0 0.0
        %1134 = vmatpush.msra.mxu0 0.0
        %1135 = vmatpush.msra.mxu0 0.0
        %1136 = vmatpush.msra.mxu0 0.0
        %1137 = vmatpush.msra.mxu0 0.0
        %v1138 = vand.u32 %v500, 4294901760
        %1139 = vmatpush.msra.mxu0 %v1138
        %v1140 = vand.u32 %v499, 4294901760
        %1141 = vmatpush.msra.mxu0 %v1140
        %v1142 = vand.u32 %v986, 4294901760
        %1143 = vmatmul.f32.gmra.mxu0 %v1142
        %v1144 = vpop.f32.mrf.mxu0
        %v1145 = vadd.f32 %v1122, %v1144
        %1146 = vdwg.mxu0
        %v1147 = vmul.f32 %v983, %v983
        %v1148 = vmul.f32 %v1147, 0.020408163
        %v1149 = vsub.f32 %v1145, %v1148
        %v1150 = vmul.f32 %v1149, 0.020833334
        %v1151 = vmax.f32 %v1150, 0.0
        %s1152 = smul.u32 %s27, 8
        %s1153 = scalar_lea.vmem %s474, %s1152
        %v1154 = vld [vmem:[%s1153] sm:$0xff]
        %v1155 = vld [vmem:[%s482] sm:$0xff]
        %vm1156 = vcmp.lt.f32.partialorder %v1154, %v1155
        %v1157 = vstv %s490
        %v1158 = vmul.f32 %v1157, %v1151
        %v1159 = vsel %vm1156, 0.0, %v1158
        %v1160 = vld [vmem:[%s419] sm:$0xff]
        %v1161 = vld [vmem:[%s419 + $0x8] sm:$0xff]
        %v1162 = vld [vmem:[%s419 + $0x10] sm:$0xff]
        %v1163 = vld [vmem:[%s412] sm:$0xff]
        %v1164 = vld [vmem:[%s412 + $0x8] sm:$0xff]
        %v1165 = vld [vmem:[%s412 + $0x10] sm:$0xff]
        %v1166 = vsub.f32 %v1160, %v1163
        %v1167 = vsub.f32 %v1161, %v1164
        %v1168 = vsub.f32 %v1162, %v1165
        %v1169 = vand.u32 2147483647, %v1166
        %v1170 = vand.u32 2147483647, %v1167
        %v1171 = vand.u32 2147483647, %v1168
        %v1172 = vmul.f32 %v1159, %v1169
        %v1173 = vmul.f32 %v1159, %v1170
        %v1174 = vmul.f32 %v1159, %v1171
        %1175 = vst.msk [vmem:[%s469] sm:$0xff] %vm501, %v1172
        %1176 = vst.msk [vmem:[%s469 + $0x8] sm:$0xff] %vm501, %v1173
        %1177 = vst.msk [vmem:[%s469 + $0x10] sm:$0xff] %vm501, %v1174
        %s1178 = sand.u32 %s222, 1
        %s1179 = scalar_lea.sflag [#allocation3], %s1178
        %s1180 = sand.u32 %s222, 1
        %s1181 = smul.addr %s1180, 24
        %s1182 = scalar_lea.vmem [#allocation7], %s1181
        // Predicated region
        $region129: #{artifacts_loss.1} parent=115 // pred_check
          %p1183 = pneg %p232
        $region130: #{artifacts_loss.1} parent=115 // pred_check_branch
          %1185 = sbr.rel (%p1183) target = $region132
        $region131: #{artifacts_loss.1} parent=115 // pred_region
          %1187 = vsyncadd %s1179, 0
          %s1188 = smul.addr %s26, 6
          %s1189 = sadd.s32 %s27, %s1188
          %s1190 = smul.addr %s1189, 8
          %s1191 = scalar_lea.hbm %s7, %s1190
          %s1192 = sshll.u32 %s1182, 4
          %s1193 = int_to_ptr.vmem [resolvable:$true] %s1192
          %s1194 = sshll.u32 %s1191, 4
          %s1195 = int_to_ptr.hbm [resolvable:$true] %s1194
          %1200 = dma.vmem_to_hbm [thread:$0]  %s1193, 384, %s1195, %s1179, 128, 256, 8
        $region132: #{artifacts_loss.1} parent=115 // pred_fallthru
          _
      $region116: #{artifacts_loss.1} parent=5 // pred_fallthru
        _
      %p1201 = scmp.le.s32.totalorder 2, %s17
      // Predicated region
      $region133: #{artifacts_loss.1} parent=5 // pred_check
        %p1202 = pneg %p1201
      $region134: #{artifacts_loss.1} parent=5 // pred_check_branch
        %1204 = sbr.rel (%p1202) target = $region136
      $region135: #{artifacts_loss.1} parent=5 // pred_region
        %s1205 = ssub.s32 %s17, 2
        // Predicated region
        $region137: #{artifacts_loss.1} parent=135 // pred_check
          %p1206 = pneg %p238
        $region138: #{artifacts_loss.1} parent=135 // pred_check_branch
          %1208 = sbr.rel (%p1206) target = $region140
        $region139: #{artifacts_loss.1} parent=135 // pred_region
          %s1209 = sand.u32 %s223, 1
          %s1210 = scalar_lea.sflag [#allocation3], %s1209
          %s1211 = sand.u32 %s223, 1
          %s1212 = smul.addr %s1211, 24
          %s1213 = scalar_lea.vmem [#allocation7], %s1212
          %1215 = dma.done %s1210, 384
        $region140: #{artifacts_loss.1} parent=135 // pred_fallthru
          _
      $region136: #{artifacts_loss.1} parent=5 // pred_fallthru
        _
    $region6: #{artifacts_loss.1} parent=1 // loop_footer
      %s21 = sadd.s32 1, %s17
    $region7: #{artifacts_loss.1} parent=1 // loop_footer_branch
      %16 = sbr.rel target = $region3
    $region8: #{artifacts_loss.1} parent=1 // loop_exit
      _
    %1216 = vsyncpa [#allocation3], 1
    %s1217 = scalar_lea.sflag [#allocation3], 1
    %1218 = vsyncpa %s1217, 1
    %1219 = vsyncpa [#allocation4], 1
    %s1220 = scalar_lea.sflag [#allocation4], 1
    %1221 = vsyncpa %s1220, 1

</llo_original>
